<compile_context>
chip_gen: v7x
topology: tpu7x:2x2x1
jax: 0.10.0
libtpu: 0.0.40
codegen_flags: <defaults>
</compile_context>

<pallas_src>
import math

import jax
import jax.numpy as jnp
from jax.experimental import pallas as pl
from jax.experimental.pallas import tpu as pltpu


def _round_up(x, m):
    return ((x + m - 1) // m) * m


def _cdiv(a, b):
    return (a + b - 1) // b


def _vmem_capacity_bytes():
    """Physical VMEM per TensorCore; falls back to the smallest (v7x) value."""
    try:
        return int(pltpu.get_tpu_info().vmem_capacity_bytes)
    except Exception:
        return 64 * 1024 * 1024


def _make_kernel(*, mask_mode, has_kbias, cache_kv, d_model_pad,
                 matmul_dtype, approx_recip):
    """Kernel factory; all static config captured by closure."""

    def kernel(*refs):
        mol_ref, sub_ref, wq_ref, bq_ref, wkv_ref, bkv_ref = refs[:6]
        pos = 6
        mask_ref = None
        if mask_mode != "none":
            mask_ref = refs[pos]
            pos += 1
        kbias_ref = None
        if has_kbias:
            kbias_ref = refs[pos]
            pos += 1
        out_ref, scores_ref = refs[pos], refs[pos + 1]
        pos += 2
        kv_scr = refs[pos] if cache_kv else None

        bt, tq, d_mol = mol_ref.shape
        _, lkp, d_sub = sub_ref.shape
        dmp = d_model_pad
        cdt = matmul_dtype

        # ---- K/V projection: once per batch-block, cached in VMEM ----
        if cache_kv:
            @pl.when(pl.program_id(1) == 0)
            def _():
                sub2 = sub_ref[...].reshape(bt * lkp, d_sub)
                kvf = (jnp.dot(sub2, wkv_ref[...],
                               preferred_element_type=jnp.float32)
                       + bkv_ref[...])
                kv_scr[...] = kvf.reshape(bt, lkp, 2 * dmp).astype(kv_scr.dtype)
            k = kv_scr[:, :, :dmp]
            v = kv_scr[:, :, dmp:]
        else:
            sub2 = sub_ref[...].reshape(bt * lkp, d_sub)
            kvf = (jnp.dot(sub2, wkv_ref[...],
                           preferred_element_type=jnp.float32) + bkv_ref[...])
            kv = kvf.reshape(bt, lkp, 2 * dmp).astype(cdt)
            k = kv[:, :, :dmp]
            v = kv[:, :, dmp:]

        # ---- Q projection (1/sqrt(d_model) already folded into wq/bq) ----
        mol2 = mol_ref[...].reshape(bt * tq, d_mol)
        q = (jnp.dot(mol2, wq_ref[...], preferred_element_type=jnp.float32)
             + bq_ref[...])
        q = q.reshape(bt, tq, dmp).astype(cdt)

        # ---- scores = q @ k^T (batched dot_general, no XLU transpose) ----
        scores = jnp.einsum("bqd,bkd->bqk", q, k,
                            preferred_element_type=jnp.float32)

        if mask_mode != "none":
            keep = mask_ref[...] != 0            # int8 compare, no up-cast
            scores = jnp.where(keep, scores, jnp.float32(-1e9))
        if has_kbias:
            # (1, lk_pad) additive row: 0 on real keys, -3e9 on padded keys
            # (strictly below the -1e9 user-mask fill so fully user-masked
            # rows still match the reference's uniform-over-Lk behaviour).
            scores = scores + kbias_ref[...]

        # ---- numerically stable softmax (f32); reciprocal on the EUP ----
        m = jnp.max(scores, axis=-1, keepdims=True)
        e = jnp.exp(scores - m)
        denom = jnp.sum(e, axis=-1, keepdims=True)
        probs = e * pl.reciprocal(denom, approx=approx_recip)

        out = jnp.einsum("bqk,bkd->bqd", probs.astype(cdt), v,
                         preferred_element_type=jnp.float32)
        out_ref[...] = out.astype(out_ref.dtype)
        scores_ref[...] = probs.astype(scores_ref.dtype)

    return kernel


def cross_attention(mol_embedding, sub_embedding, params, mask=None, *,
                    matmul_dtype=jnp.bfloat16, out_dtype=jnp.float32,
                    scores_dtype=jnp.float32, approx_recip=True):
    """Pallas implementation of CrossAttention.forward -> (output, scores)."""
    B, Lq, d_mol = mol_embedding.shape
    Bs, Lk, d_sub = sub_embedding.shape
    assert Bs == B
    wq, bq, wk, bk, wv, bv = (params["wq"], params["bq"], params["wk"],
                              params["bk"], params["wv"], params["bv"])
    d_model = wq.shape[1]
    scale = 1.0 / math.sqrt(float(d_model))

    # ---- lane-dense padded sizes & balanced q tiling ----
    dmp = _round_up(d_model, 128)          # out / k / v feature dim (lanes)
    lk_pad = _round_up(Lk, 128)            # scores last dim (lanes)
    n_q = _cdiv(Lq, 512)                   # <=512 query rows per tile
    tq = _round_up(_cdiv(Lq, n_q), 8)      # balanced -> <=7 padded rows/tile
    lq_pad = n_q * tq
    cache_kv = n_q > 1                     # reuse K/V across q tiles

    has_kbias = lk_pad > Lk
    mask_mode = "none"
    if mask is not None:
        mask = jnp.asarray(mask)
        if mask.ndim == 3 and mask.shape[1] == 1:
            mask_mode = "key"              # compact (B,1,Lk): no Lq-broadcast DMA
        else:
            mask_mode = "full"

    act_bytes = jnp.dtype(matmul_dtype).itemsize
    out_bytes = jnp.dtype(out_dtype).itemsize
    sc_bytes = jnp.dtype(scores_dtype).itemsize
    mask_rows = {"none": 0, "key": 1, "full": tq}[mask_mode]

    # ---- VMEM-aware batch tile + explicit scoped-VMEM limit ----
    vmem_cap = _vmem_capacity_bytes()
    vmem_limit = int(vmem_cap * 0.9)
    budget = int(vmem_limit * 0.6)         # headroom for compiler scratch

    def vmem_need(bt):
        need = 2 * (bt * tq * d_mol * act_bytes          # mol (double-buffered)
                    + bt * lk_pad * d_sub * act_bytes    # sub
                    + bt * tq * dmp * out_bytes          # out
                    + bt * tq * lk_pad * sc_bytes)       # scores
        if mask_rows:
            need += 2 * bt * mask_rows * lk_pad          # int8 mask
        # single-buffered weights / biases / key-pad bias row
        need += (d_mol * dmp + d_sub * 2 * dmp) * act_bytes + 3 * dmp * 4 + lk_pad * 4
        if cache_kv:
            need += bt * lk_pad * 2 * dmp * act_bytes    # kv VMEM scratch
        # f32 intermediates: q, kv temp, ~3 scores-sized temporaries
        need += (bt * tq * dmp * 4 + bt * lk_pad * 2 * dmp * 4
                 + 3 * bt * tq * lk_pad * 4)
        return need

    # Cap bt so B>=2 always gives >=2 batch grid steps (feeds both v7x cores).
    bt_hi = B if B < 2 else _cdiv(B, 2)
    bt = 1
    for cand in range(max(1, bt_hi), 0, -1):
        if vmem_need(cand) <= budget:
            bt = cand
            break
    # TODO(synk): if even bt=1 exceeds the budget (huge Lk), also tile the key axis.

    b_pad = _round_up(B, bt)
    grid = (b_pad // bt, n_q)

    f32 = jnp.float32
    # ---- host-side packing / padding (tiny vs. the attention math) ----
    mol_p = jnp.pad(mol_embedding.astype(matmul_dtype),
                    ((0, b_pad - B), (0, lq_pad - Lq), (0, 0)))
    sub_p = jnp.pad(sub_embedding.astype(matmul_dtype),
                    ((0, b_pad - B), (0, lk_pad - Lk), (0, 0)))

    pad_w = lambda w: jnp.pad(w.astype(f32), ((0, 0), (0, dmp - d_model)))
    pad_b = lambda b: jnp.pad(b.astype(f32), ((0, dmp - d_model),))
    # fold the softmax scale into the Q projection
    wq_p = pad_w(wq * scale).astype(matmul_dtype)
    bq_p = pad_b(bq * scale).reshape(1, dmp)
    wkv_p = jnp.concatenate([pad_w(wk), pad_w(wv)], axis=1).astype(matmul_dtype)
    bkv_p = jnp.concatenate([pad_b(bk), pad_b(bv)], axis=0).reshape(1, 2 * dmp)

    # constant-index operands: single-buffered (saves VMEM, index never changes)
    const = lambda shape: pl.BlockSpec(shape, lambda b, q: (0, 0),
                                       pipeline_mode=pl.Buffered(1))

    inputs = [mol_p, sub_p, wq_p, bq_p, wkv_p, bkv_p]
    in_specs = [
        pl.BlockSpec((bt, tq, d_mol), lambda b, q: (b, q, 0)),       # mol
        pl.BlockSpec((bt, lk_pad, d_sub), lambda b, q: (b, 0, 0)),   # sub
        const((d_mol, dmp)),                                         # wq
        const((1, dmp)),                                             # bq
        const((d_sub, 2 * dmp)),                                     # wkv
        const((1, 2 * dmp)),                                         # bkv
    ]

    if mask_mode == "key":
        mask_b = jnp.broadcast_to(mask, (B, 1, Lk)).astype(jnp.int8)
        mask_p = jnp.pad(mask_b, ((0, b_pad - B), (0, 0), (0, lk_pad - Lk)))
        inputs.append(mask_p)
        in_specs.append(pl.BlockSpec((bt, 1, lk_pad), lambda b, q: (b, 0, 0)))
    elif mask_mode == "full":
        mask_b = jnp.broadcast_to(mask, (B, Lq, Lk)).astype(jnp.int8)
        mask_p = jnp.pad(mask_b, ((0, b_pad - B), (0, lq_pad - Lq),
                                  (0, lk_pad - Lk)))
        inputs.append(mask_p)
        in_specs.append(pl.BlockSpec((bt, tq, lk_pad), lambda b, q: (b, q, 0)))

    if has_kbias:
        kbias = jnp.where(jnp.arange(lk_pad) < Lk, 0.0, -3e9).astype(f32)
        inputs.append(kbias.reshape(1, lk_pad))
        in_specs.append(const((1, lk_pad)))

    out_shape = (
        jax.ShapeDtypeStruct((b_pad, lq_pad, dmp), out_dtype),
        jax.ShapeDtypeStruct((b_pad, lq_pad, lk_pad), scores_dtype),
    )
    out_specs = [
        pl.BlockSpec((bt, tq, dmp), lambda b, q: (b, q, 0)),
        pl.BlockSpec((bt, tq, lk_pad), lambda b, q: (b, q, 0)),
    ]

    scratch = ([pltpu.VMEM((bt, lk_pad, 2 * dmp), matmul_dtype)]
               if cache_kv else [])

    kernel = _make_kernel(mask_mode=mask_mode, has_kbias=has_kbias,
                          cache_kv=cache_kv, d_model_pad=dmp,
                          matmul_dtype=matmul_dtype, approx_recip=approx_recip)

    fn = pl.pallas_call(
        kernel,
        out_shape=out_shape,
        grid_spec=pltpu.PrefetchScalarGridSpec(
            num_scalar_prefetch=0,
            grid=grid,
            in_specs=in_specs,
            out_specs=out_specs,
            scratch_shapes=scratch,
        ),
        compiler_params=pltpu.CompilerParams(
            dimension_semantics=("parallel",
                                 "arbitrary" if cache_kv else "parallel"),
            vmem_limit_bytes=vmem_limit,
        ),
    )
    out_p, scores_p = fn(*inputs)
    # Slice lane/row padding back off.
    return out_p[:B, :Lq, :d_model], scores_p[:B, :Lq, :Lk]


def init_params(key, d_mol, d_sub, d_model):
    """Deterministic synthetic init (mimics nn.Linear's uniform fan-in init)."""
    ks = jax.random.split(key, 6)

    def lin(kw, kb, d_in):
        bound = 1.0 / math.sqrt(d_in)
        w = jax.random.uniform(kw, (d_in, d_model), jnp.float32, -bound, bound)
        b = jax.random.uniform(kb, (d_model,), jnp.float32, -bound, bound)
        return w, b

    wq, bq = lin(ks[0], ks[1], d_mol)
    wk, bk = lin(ks[2], ks[3], d_sub)
    wv, bv = lin(ks[4], ks[5], d_sub)
    return dict(wq=wq, bq=bq, wk=wk, bk=bk, wv=wv, bv=bv)


def _reference(mol, sub, params, mask=None):
    q = mol @ params["wq"] + params["bq"]
    k = sub @ params["wk"] + params["bk"]
    v = sub @ params["wv"] + params["bv"]
    scores = jnp.einsum("bqd,bkd->bqk", q, k) / math.sqrt(k.shape[-1])
    if mask is not None:
        scores = jnp.where(mask == 0, -1e9, scores)
    probs = jax.nn.softmax(scores, axis=-1)
    return probs @ v, probs


if __name__ == "__main__":
    B, Lq, Lk = 2, 8, 8
    d_mol, d_sub, d_model = 16, 12, 32

    key = jax.random.PRNGKey(0)
    k_mol, k_sub, k_mask, k_params, k_mol2, k_mask2 = jax.random.split(key, 6)

    mol = jax.random.normal(k_mol, (B, Lq, d_mol), jnp.float32)
    sub = jax.random.normal(k_sub, (B, Lk, d_sub), jnp.float32)
    mask = (jax.random.uniform(k_mask, (B, Lq, Lk)) > 0.2).astype(jnp.int32)
    params = init_params(k_params, d_mol, d_sub, d_model)
    ref_out, ref_scores = _reference(mol, sub, params, mask=mask)

    # 1) default path: bf16 MXU (f32 accum / f32 softmax), full mask
    out, scores = cross_attention(mol, sub, params, mask=mask)
    out = jax.block_until_ready(out)
    scores = jax.block_until_ready(scores)
    assert jnp.allclose(out, ref_out, atol=5e-2, rtol=5e-2)
    assert jnp.allclose(scores, ref_scores, atol=5e-2, rtol=5e-2)

    # 2) f32 MXU + exact reciprocal -> tight tolerance
    out_f, scores_f = cross_attention(mol, sub, params, mask=mask,
                                      matmul_dtype=jnp.float32,
                                      approx_recip=False)
    out_f = jax.block_until_ready(out_f)
    assert jnp.allclose(out_f, ref_out, atol=2e-3, rtol=2e-3)
    assert jnp.allclose(scores_f, ref_scores, atol=2e-3, rtol=2e-3)

    # 3) mask=None path (no mask input, no select in kernel)
    out_nm, scores_nm = cross_attention(mol, sub, params, mask=None)
    out_nm = jax.block_until_ready(out_nm)
    ref_out_nm, ref_scores_nm = _reference(mol, sub, params, mask=None)
    assert jnp.allclose(out_nm, ref_out_nm, atol=5e-2, rtol=5e-2)
    assert jnp.allclose(scores_nm, ref_scores_nm, atol=5e-2, rtol=5e-2)

    # 4) long Lq (exercises multi-q-tile grid + cached K/V) with a compact
    #    per-key mask of shape (B, 1, Lk)
    Lq2 = 600
    mol2 = jax.random.normal(k_mol2, (B, Lq2, d_mol), jnp.float32)
    mask2 = (jax.random.uniform(k_mask2, (B, 1, Lk)) > 0.2).astype(jnp.int32)
    out_l, scores_l = cross_attention(mol2, sub, params, mask=mask2)
    out_l = jax.block_until_ready(out_l)
    ref_out_l, ref_scores_l = _reference(mol2, sub, params, mask=mask2)
    assert jnp.allclose(out_l, ref_out_l, atol=5e-2, rtol=5e-2)
    assert jnp.allclose(scores_l, ref_scores_l, atol=5e-2, rtol=5e-2)

    print("KERNEL_OK")
</pallas_src>

<mosaic_0001>
module attributes {stable_mosaic.version = 11 : i64} {
  func.func @kernel(%arg0: i32, %arg1: i32, %arg2: memref<1x8x16xbf16, #tpu.memory_space<vmem>>, %arg3: memref<1x128x12xbf16, #tpu.memory_space<vmem>>, %arg4: memref<16x128xbf16, #tpu.memory_space<vmem>>, %arg5: memref<1x128xf32, #tpu.memory_space<vmem>>, %arg6: memref<12x256xbf16, #tpu.memory_space<vmem>>, %arg7: memref<1x256xf32, #tpu.memory_space<vmem>>, %arg8: memref<1x8x128xi8, #tpu.memory_space<vmem>>, %arg9: memref<1x128xf32, #tpu.memory_space<vmem>>, %arg10: memref<1x8x128xf32, #tpu.memory_space<vmem>>, %arg11: memref<1x8x128xf32, #tpu.memory_space<vmem>>) attributes {dimension_semantics = [#tpu.dimension_semantics<parallel>, #tpu.dimension_semantics<parallel>], iteration_bounds = array<i64: 2, 1>, scalar_prefetch = 0 : i64, scratch_operands = 0 : i64, tpu.core_type = #tpu.core_type<tc>, window_params = [{transform_indices = @transform_0, window_bounds = array<i64: 1, 8, 16>}, {transform_indices = @transform_1, window_bounds = array<i64: 1, 128, 12>}, {pipeline_mode = #tpu.pipeline_mode<synchronous>, transform_indices = @transform_2, window_bounds = array<i64: 16, 128>}, {pipeline_mode = #tpu.pipeline_mode<synchronous>, transform_indices = @transform_3, window_bounds = array<i64: 1, 128>}, {pipeline_mode = #tpu.pipeline_mode<synchronous>, transform_indices = @transform_4, window_bounds = array<i64: 12, 256>}, {pipeline_mode = #tpu.pipeline_mode<synchronous>, transform_indices = @transform_5, window_bounds = array<i64: 1, 256>}, {transform_indices = @transform_6, window_bounds = array<i64: 1, 8, 128>}, {pipeline_mode = #tpu.pipeline_mode<synchronous>, transform_indices = @transform_7, window_bounds = array<i64: 1, 128>}, {transform_indices = @transform_8, window_bounds = array<i64: 1, 8, 128>}, {transform_indices = @transform_9, window_bounds = array<i64: 1, 8, 128>}]} {
    %c0 = arith.constant 0 : index
    %c0_0 = arith.constant 0 : index
    %c0_1 = arith.constant 0 : index
    %0 = vector.load %arg3[%c0, %c0_0, %c0_1] : memref<1x128x12xbf16, #tpu.memory_space<vmem>>, vector<1x128x12xbf16>
    %1 = vector.shape_cast %0 : vector<1x128x12xbf16> to vector<128x12xbf16>
    %c0_2 = arith.constant 0 : index
    %c0_3 = arith.constant 0 : index
    %2 = vector.load %arg6[%c0_2, %c0_3] : memref<12x256xbf16, #tpu.memory_space<vmem>>, vector<12x256xbf16>
    %cst = arith.constant dense<0.000000e+00> : vector<128x256xf32>
    %3 = tpu.matmul %1, %2, %cst {dimension_numbers = #tpu.dot_dimension_numbers<[1], [0], [0], [1], [0, 0, 1, 1], [], []>} : vector<128x12xbf16>, vector<12x256xbf16>, vector<128x256xf32> -> vector<128x256xf32>
    %c0_4 = arith.constant 0 : index
    %c0_5 = arith.constant 0 : index
    %4 = vector.load %arg7[%c0_4, %c0_5] : memref<1x256xf32, #tpu.memory_space<vmem>>, vector<1x256xf32>
    %5 = vector.broadcast %4 : vector<1x256xf32> to vector<128x256xf32>
    %6 = arith.addf %3, %5 : vector<128x256xf32>
    %7 = vector.shape_cast %6 : vector<128x256xf32> to vector<1x128x256xf32>
    %8 = arith.truncf %7 : vector<1x128x256xf32> to vector<1x128x256xbf16>
    %9 = vector.extract_strided_slice %8 {offsets = [0, 0, 0], sizes = [1, 128, 128], strides = [1, 1, 1]} : vector<1x128x256xbf16> to vector<1x128x128xbf16>
    %10 = vector.extract_strided_slice %8 {offsets = [0, 0, 128], sizes = [1, 128, 128], strides = [1, 1, 1]} : vector<1x128x256xbf16> to vector<1x128x128xbf16>
    %c0_6 = arith.constant 0 : index
    %c0_7 = arith.constant 0 : index
    %c0_8 = arith.constant 0 : index
    %11 = vector.load %arg2[%c0_6, %c0_7, %c0_8] : memref<1x8x16xbf16, #tpu.memory_space<vmem>>, vector<1x8x16xbf16>
    %12 = vector.shape_cast %11 : vector<1x8x16xbf16> to vector<8x16xbf16>
    %c0_9 = arith.constant 0 : index
    %c0_10 = arith.constant 0 : index
    %13 = vector.load %arg4[%c0_9, %c0_10] : memref<16x128xbf16, #tpu.memory_space<vmem>>, vector<16x128xbf16>
    %cst_11 = arith.constant dense<0.000000e+00> : vector<8x128xf32>
    %14 = tpu.matmul %12, %13, %cst_11 {dimension_numbers = #tpu.dot_dimension_numbers<[1], [0], [0], [1], [0, 0, 1, 1], [], []>} : vector<8x16xbf16>, vector<16x128xbf16>, vector<8x128xf32> -> vector<8x128xf32>
    %c0_12 = arith.constant 0 : index
    %c0_13 = arith.constant 0 : index
    %15 = vector.load %arg5[%c0_12, %c0_13] : memref<1x128xf32, #tpu.memory_space<vmem>>, vector<1x128xf32>
    %16 = vector.broadcast %15 : vector<1x128xf32> to vector<8x128xf32>
    %17 = arith.addf %14, %16 : vector<8x128xf32>
    %18 = vector.shape_cast %17 : vector<8x128xf32> to vector<1x8x128xf32>
    %19 = arith.truncf %18 : vector<1x8x128xf32> to vector<1x8x128xbf16>
    "tpu.trace_start"() <{level = 10 : i32, message = "bqd,bkd->bqk"}> : () -> ()
    %cst_14 = arith.constant dense<0.000000e+00> : vector<1x8x128xf32>
    %20 = tpu.matmul %19, %9, %cst_14 {dimension_numbers = #tpu.dot_dimension_numbers<[2], [2], [1], [1], [0, 0, 0, 1, 1, 1], [0], [0]>} : vector<1x8x128xbf16>, vector<1x128x128xbf16>, vector<1x8x128xf32> -> vector<1x8x128xf32>
    "tpu.trace_stop"() : () -> ()
    %c0_15 = arith.constant 0 : index
    %c0_16 = arith.constant 0 : index
    %c0_17 = arith.constant 0 : index
    %21 = vector.load %arg8[%c0_15, %c0_16, %c0_17] : memref<1x8x128xi8, #tpu.memory_space<vmem>>, vector<1x8x128xi8>
    %c0_i8 = arith.constant 0 : i8
    %22 = vector.broadcast %c0_i8 : i8 to vector<1x8x128xi8>
    %23 = arith.cmpi ne, %21, %22 : vector<1x8x128xi8>
    %cst_18 = arith.constant -1.000000e+09 : f32
    %24 = vector.broadcast %cst_18 : f32 to vector<1x8x128xf32>
    %25 = arith.select %23, %20, %24 : vector<1x8x128xi1>, vector<1x8x128xf32>
    %c0_19 = arith.constant 0 : index
    %c0_20 = arith.constant 0 : index
    %26 = vector.load %arg9[%c0_19, %c0_20] : memref<1x128xf32, #tpu.memory_space<vmem>>, vector<1x128xf32>
    %27 = vector.shape_cast %26 : vector<1x128xf32> to vector<1x1x128xf32>
    %28 = vector.broadcast %27 : vector<1x1x128xf32> to vector<1x8x128xf32>
    %29 = arith.addf %25, %28 : vector<1x8x128xf32>
    %cst_21 = arith.constant dense<0xFF800000> : vector<1x8xf32>
    %30 = vector.multi_reduction <maximumf>, %29, %cst_21 [2] : vector<1x8x128xf32> to vector<1x8xf32>
    %31 = vector.shape_cast %30 : vector<1x8xf32> to vector<1x8x1xf32>
    %32 = vector.broadcast %31 : vector<1x8x1xf32> to vector<1x8x128xf32>
    %33 = arith.subf %29, %32 : vector<1x8x128xf32>
    %34 = math.exp %33 : vector<1x8x128xf32>
    %cst_22 = arith.constant dense<0.000000e+00> : vector<1x8xf32>
    %35 = vector.multi_reduction <add>, %34, %cst_22 [2] : vector<1x8x128xf32> to vector<1x8xf32>
    %36 = vector.shape_cast %35 : vector<1x8xf32> to vector<1x8x1xf32>
    %37 = tpu.reciprocal %36 {approx = true} : vector<1x8x1xf32> -> vector<1x8x1xf32>
    %38 = vector.broadcast %37 : vector<1x8x1xf32> to vector<1x8x128xf32>
    %39 = arith.mulf %34, %38 : vector<1x8x128xf32>
    %40 = arith.truncf %39 : vector<1x8x128xf32> to vector<1x8x128xbf16>
    "tpu.trace_start"() <{level = 10 : i32, message = "bqk,bkd->bqd"}> : () -> ()
    %cst_23 = arith.constant dense<0.000000e+00> : vector<1x8x128xf32>
    %41 = tpu.matmul %40, %10, %cst_23 {dimension_numbers = #tpu.dot_dimension_numbers<[2], [1], [1], [2], [0, 0, 0, 1, 1, 2], [0], [0]>} : vector<1x8x128xbf16>, vector<1x128x128xbf16>, vector<1x8x128xf32> -> vector<1x8x128xf32>
    "tpu.trace_stop"() : () -> ()
    %c0_24 = arith.constant 0 : index
    %c0_25 = arith.constant 0 : index
    %c0_26 = arith.constant 0 : index
    %42 = vector.load %arg10[%c0_24, %c0_25, %c0_26] : memref<1x8x128xf32, #tpu.memory_space<vmem>>, vector<1x8x128xf32>
    tpu.vector_store %arg10[%c0_24, %c0_25, %c0_26], %41 {strides = array<i32>} : memref<1x8x128xf32, #tpu.memory_space<vmem>>, vector<1x8x128xf32>,
    %c0_27 = arith.constant 0 : index
    %c0_28 = arith.constant 0 : index
    %c0_29 = arith.constant 0 : index
    %43 = vector.load %arg11[%c0_27, %c0_28, %c0_29] : memref<1x8x128xf32, #tpu.memory_space<vmem>>, vector<1x8x128xf32>
    tpu.vector_store %arg11[%c0_27, %c0_28, %c0_29], %39 {strides = array<i32>} : memref<1x8x128xf32, #tpu.memory_space<vmem>>, vector<1x8x128xf32>,
    return
  }
  func.func @transform_0(%arg0: i32, %arg1: i32) -> (i32, i32, i32) {
    %c0_i32 = arith.constant 0 : i32
    %c0_i32_0 = arith.constant 0 : i32
    return %arg0, %arg1, %c0_i32 : i32, i32, i32
  }
  func.func @transform_1(%arg0: i32, %arg1: i32) -> (i32, i32, i32) {
    %c0_i32 = arith.constant 0 : i32
    %c0_i32_0 = arith.constant 0 : i32
    %c0_i32_1 = arith.constant 0 : i32
    return %arg0, %c0_i32, %c0_i32_0 : i32, i32, i32
  }
  func.func @transform_2(%arg0: i32, %arg1: i32) -> (i32, i32) {
    %c0_i32 = arith.constant 0 : i32
    %c0_i32_0 = arith.constant 0 : i32
    %c0_i32_1 = arith.constant 0 : i32
    return %c0_i32, %c0_i32_0 : i32, i32
  }
  func.func @transform_3(%arg0: i32, %arg1: i32) -> (i32, i32) {
    %c0_i32 = arith.constant 0 : i32
    %c0_i32_0 = arith.constant 0 : i32
    %c0_i32_1 = arith.constant 0 : i32
    return %c0_i32, %c0_i32_0 : i32, i32
  }
  func.func @transform_4(%arg0: i32, %arg1: i32) -> (i32, i32) {
    %c0_i32 = arith.constant 0 : i32
    %c0_i32_0 = arith.constant 0 : i32
    %c0_i32_1 = arith.constant 0 : i32
    return %c0_i32, %c0_i32_0 : i32, i32
  }
  func.func @transform_5(%arg0: i32, %arg1: i32) -> (i32, i32) {
    %c0_i32 = arith.constant 0 : i32
    %c0_i32_0 = arith.constant 0 : i32
    %c0_i32_1 = arith.constant 0 : i32
    return %c0_i32, %c0_i32_0 : i32, i32
  }
  func.func @transform_6(%arg0: i32, %arg1: i32) -> (i32, i32, i32) {
    %c0_i32 = arith.constant 0 : i32
    %c0_i32_0 = arith.constant 0 : i32
    return %arg0, %arg1, %c0_i32 : i32, i32, i32
  }
  func.func @transform_7(%arg0: i32, %arg1: i32) -> (i32, i32) {
    %c0_i32 = arith.constant 0 : i32
    %c0_i32_0 = arith.constant 0 : i32
    %c0_i32_1 = arith.constant 0 : i32
    return %c0_i32, %c0_i32_0 : i32, i32
  }
  func.func @transform_8(%arg0: i32, %arg1: i32) -> (i32, i32, i32) {
    %c0_i32 = arith.constant 0 : i32
    %c0_i32_0 = arith.constant 0 : i32
    return %arg0, %arg1, %c0_i32 : i32, i32, i32
  }
  func.func @transform_9(%arg0: i32, %arg1: i32) -> (i32, i32, i32) {
    %c0_i32 = arith.constant 0 : i32
    %c0_i32_0 = arith.constant 0 : i32
    return %arg0, %arg1, %c0_i32 : i32, i32, i32
  }
}

</mosaic_0001>

<llo_original>
// kernel: tpu_custom_call.1
$region0: #{tpu_custom_call.1}
  #allocation0 [shape = 'u32[]', space=smem, size = 0x4, offset = 0x4, fixed_abs, tag = 'smem constant byte address 0x4 - core index']
  #allocation1 [shape = 'u32[144,128]{1,0:T(1,128)}', space=vmem, size = 0x12000, scoped, tag = 'internal scratch']
  %s0 = inlined_call_operand.vmem [shape: bf16[2,8,16], index: 0, kind: input, shape index: {}]
  %s1 = inlined_call_operand.vmem [shape: bf16[2,128,12], index: 1, kind: input, shape index: {}]
  %s2 = inlined_call_operand.vmem [shape: bf16[16,128], index: 2, kind: input, shape index: {}]
  %s3 = inlined_call_operand.vmem [shape: f32[1,128], index: 3, kind: input, shape index: {}]
  %s4 = inlined_call_operand.vmem [shape: bf16[12,256], index: 4, kind: input, shape index: {}]
  %s5 = inlined_call_operand.vmem [shape: f32[1,256], index: 5, kind: input, shape index: {}]
  %s6 = inlined_call_operand.vmem [shape: s8[2,8,128], index: 6, kind: input, shape index: {}]
  %s7 = inlined_call_operand.vmem [shape: f32[1,128], index: 7, kind: input, shape index: {}]
  %s8 = inlined_call_operand.hbm [shape: f32[2,8,128], index: 8, kind: output, shape index: {0}]
  %s9 = inlined_call_operand.hbm [shape: f32[2,8,128], index: 9, kind: output, shape index: {1}]
  %10 = xla_tuple %s8, %s9
  %s11 = sld [smem:[#allocation0]]
  $region73: #{tpu_custom_call.1} parent=0
    _
  %s13 = ssub.s32 1, %s11
  %s14 = scalar_select 0, %s13, %s11
  $region1: #{tpu_custom_call.1} parent=0
    #allocation2 [shape = 'u8[8192]{0}', space=vmem, size = 0x2000, scoped, tag = 'output window, operand 0']
    #allocation3 [shape = 's32[2]{0}', space=sflag, size = 0x8, scoped, tag = 'scoped memory for tpu_custom_call.1']
    #allocation4 [shape = 'u8[8192]{0}', space=vmem, size = 0x2000, scoped, tag = 'output window, operand 1']
    #allocation5 [shape = 's32[2]{0}', space=sflag, size = 0x8, scoped, tag = 'scoped memory for tpu_custom_call.1']
    %15 = vsyncpa [#allocation3], 0
    %s16 = scalar_lea.sflag [#allocation3], 1
    %17 = vsyncpa %s16, 0
    %18 = vsyncpa [#allocation5], 0
    %s19 = scalar_lea.sflag [#allocation5], 1
    %20 = vsyncpa %s19, 0
    loop: start=0, step=1, limit=4
    $region2: #{tpu_custom_call.1} parent=1 // loop_pre_header
      _
    $region3: #{tpu_custom_call.1} parent=1 // loop_header
      %s22 = sphi 0, %s26
      %p23 = scmp.ge.s32.totalorder %s22, 4
      %s29 = sphi 0, %s41
      %s30 = sphi 0, %s37
      %s31 = sphi 0, %s29
      %s32 = sphi 0, %s30
      %s33 = sphi 0, %s31
      %s34 = sphi 0, %s32
      %s46 = sphi 0, %s48
      %s49 = sphi 0, %s46
      %s50 = sphi 0, %s49
      %s66 = sphi 0, %s50
      %s72 = sphi 0, %s74
      %s75 = sphi 0, %s72
      %s76 = sphi 0, %s75
      %s92 = sphi 0, %s76
      %s96 = sphi 0, %s96
      %s98 = sphi 0, %s96
      %s99 = sphi 0, %s98
      %s113 = sphi 0, %s99
      %s117 = sphi 0, %s117
      %s119 = sphi 0, %s117
      %s120 = sphi 0, %s119
      %s134 = sphi 0, %s120
      %s138 = sphi 0, %s138
      %s140 = sphi 0, %s138
      %s141 = sphi 0, %s140
      %s155 = sphi 0, %s141
      %s159 = sphi 0, %s159
      %s161 = sphi 0, %s159
      %s162 = sphi 0, %s161
      %s176 = sphi 0, %s162
      %s184 = sphi 0, %s186
      %s187 = sphi 0, %s184
      %s188 = sphi 0, %s187
      %s204 = sphi 0, %s188
      %s208 = sphi 0, %s208
      %s210 = sphi 0, %s208
      %s211 = sphi 0, %s210
      %s225 = sphi 0, %s211
      %s233 = sphi 0, %s235
      %s236 = sphi 0, %s233
      %s237 = sphi 0, %s236
      %s253 = sphi 0, %s237
      %s261 = sphi 0, %s263
      %s264 = sphi 0, %s261
      %s265 = sphi 0, %s264
      %s281 = sphi 0, %s265
    $region4: #{tpu_custom_call.1} parent=1 // loop_header_branch
      %25 = sbr.rel (%p23) target = $region8
    $region5: #{tpu_custom_call.1} parent=1 // loop_body
      %s27 = ssub.s32 %s22, 1
      %s28 = ssub.s32 %s22, 2
      %s35 = sadd.s32 1, %s30
      %p36 = scmp.ge.s32.totalorder %s35, 1
      %s37 = scalar_select %p36, 0, %s35
      %s38 = sadd.s32 1, %s29
      %s39 = scalar_select %p36, %s38, %s29
      %p40 = scmp.ge.s32.totalorder %s39, 2
      %s41 = scalar_select %p40, 0, %s39
      %s42 = ssub.s32 %s29, %s41
      %s43 = ssub.s32 %s30, %s37
      %s44 = sor.u32 %s42, %s43
      %p45 = scmp.eq.s32.totalorder %s44, 0
      %s47 = sadd.s32 %s46, 1
      %s48 = scalar_select %p45, %s46, %s47
      %p51 = pneg %p45
      %p52 = scmp.eq.s32.totalorder %s22, 1
      %p53 = por %p51, %p52
      %p54 = scmp.ne.s32.totalorder %s46, %s49
      %p55 = scmp.eq.s32.totalorder %s22, 0
      %p56 = por %p54, %p55
      %p57 = scmp.ne.s32.totalorder %s46, %s49
      %p58 = scmp.eq.s32.totalorder %s27, 1
      %p59 = por %p57, %p58
      %p60 = scmp.ne.s32.totalorder %s49, %s50
      %p61 = scmp.eq.s32.totalorder %s27, 0
      %p62 = por %p60, %p61
      %p63 = scmp.ne.s32.totalorder %s49, %s50
      %p64 = scmp.eq.s32.totalorder %s28, 1
      %p65 = por %p63, %p64
      %p67 = scmp.ne.s32.totalorder %s50, %s66
      %p68 = scmp.eq.s32.totalorder %s28, 0
      %p69 = por %p67, %p68
      %s70 = ssub.s32 %s29, %s41
      %p71 = scmp.eq.s32.totalorder %s70, 0
      %s73 = sadd.s32 %s72, 1
      %s74 = scalar_select %p71, %s72, %s73
      %p77 = pneg %p71
      %p78 = scmp.eq.s32.totalorder %s22, 1
      %p79 = por %p77, %p78
      %p80 = scmp.ne.s32.totalorder %s72, %s75
      %p81 = scmp.eq.s32.totalorder %s22, 0
      %p82 = por %p80, %p81
      %p83 = scmp.ne.s32.totalorder %s72, %s75
      %p84 = scmp.eq.s32.totalorder %s27, 1
      %p85 = por %p83, %p84
      %p86 = scmp.ne.s32.totalorder %s75, %s76
      %p87 = scmp.eq.s32.totalorder %s27, 0
      %p88 = por %p86, %p87
      %p89 = scmp.ne.s32.totalorder %s75, %s76
      %p90 = scmp.eq.s32.totalorder %s28, 1
      %p91 = por %p89, %p90
      %p93 = scmp.ne.s32.totalorder %s76, %s92
      %p94 = scmp.eq.s32.totalorder %s28, 0
      %p95 = por %p93, %p94
      %s97 = sadd.s32 %s96, 1
      %p100 = scmp.eq.s32.totalorder %s22, 1
      %p101 = scmp.ne.s32.totalorder %s96, %s98
      %p102 = scmp.eq.s32.totalorder %s22, 0
      %p103 = por %p101, %p102
      %p104 = scmp.ne.s32.totalorder %s96, %s98
      %p105 = scmp.eq.s32.totalorder %s27, 1
      %p106 = por %p104, %p105
      %p107 = scmp.ne.s32.totalorder %s98, %s99
      %p108 = scmp.eq.s32.totalorder %s27, 0
      %p109 = por %p107, %p108
      %p110 = scmp.ne.s32.totalorder %s98, %s99
      %p111 = scmp.eq.s32.totalorder %s28, 1
      %p112 = por %p110, %p111
      %p114 = scmp.ne.s32.totalorder %s99, %s113
      %p115 = scmp.eq.s32.totalorder %s28, 0
      %p116 = por %p114, %p115
      %s118 = sadd.s32 %s117, 1
      %p121 = scmp.eq.s32.totalorder %s22, 1
      %p122 = scmp.ne.s32.totalorder %s117, %s119
      %p123 = scmp.eq.s32.totalorder %s22, 0
      %p124 = por %p122, %p123
      %p125 = scmp.ne.s32.totalorder %s117, %s119
      %p126 = scmp.eq.s32.totalorder %s27, 1
      %p127 = por %p125, %p126
      %p128 = scmp.ne.s32.totalorder %s119, %s120
      %p129 = scmp.eq.s32.totalorder %s27, 0
      %p130 = por %p128, %p129
      %p131 = scmp.ne.s32.totalorder %s119, %s120
      %p132 = scmp.eq.s32.totalorder %s28, 1
      %p133 = por %p131, %p132
      %p135 = scmp.ne.s32.totalorder %s120, %s134
      %p136 = scmp.eq.s32.totalorder %s28, 0
      %p137 = por %p135, %p136
      %s139 = sadd.s32 %s138, 1
      %p142 = scmp.eq.s32.totalorder %s22, 1
      %p143 = scmp.ne.s32.totalorder %s138, %s140
      %p144 = scmp.eq.s32.totalorder %s22, 0
      %p145 = por %p143, %p144
      %p146 = scmp.ne.s32.totalorder %s138, %s140
      %p147 = scmp.eq.s32.totalorder %s27, 1
      %p148 = por %p146, %p147
      %p149 = scmp.ne.s32.totalorder %s140, %s141
      %p150 = scmp.eq.s32.totalorder %s27, 0
      %p151 = por %p149, %p150
      %p152 = scmp.ne.s32.totalorder %s140, %s141
      %p153 = scmp.eq.s32.totalorder %s28, 1
      %p154 = por %p152, %p153
      %p156 = scmp.ne.s32.totalorder %s141, %s155
      %p157 = scmp.eq.s32.totalorder %s28, 0
      %p158 = por %p156, %p157
      %s160 = sadd.s32 %s159, 1
      %p163 = scmp.eq.s32.totalorder %s22, 1
      %p164 = scmp.ne.s32.totalorder %s159, %s161
      %p165 = scmp.eq.s32.totalorder %s22, 0
      %p166 = por %p164, %p165
      %p167 = scmp.ne.s32.totalorder %s159, %s161
      %p168 = scmp.eq.s32.totalorder %s27, 1
      %p169 = por %p167, %p168
      %p170 = scmp.ne.s32.totalorder %s161, %s162
      %p171 = scmp.eq.s32.totalorder %s27, 0
      %p172 = por %p170, %p171
      %p173 = scmp.ne.s32.totalorder %s161, %s162
      %p174 = scmp.eq.s32.totalorder %s28, 1
      %p175 = por %p173, %p174
      %p177 = scmp.ne.s32.totalorder %s162, %s176
      %p178 = scmp.eq.s32.totalorder %s28, 0
      %p179 = por %p177, %p178
      %s180 = ssub.s32 %s29, %s41
      %s181 = ssub.s32 %s30, %s37
      %s182 = sor.u32 %s180, %s181
      %p183 = scmp.eq.s32.totalorder %s182, 0
      %s185 = sadd.s32 %s184, 1
      %s186 = scalar_select %p183, %s184, %s185
      %p189 = pneg %p183
      %p190 = scmp.eq.s32.totalorder %s22, 1
      %p191 = por %p189, %p190
      %p192 = scmp.ne.s32.totalorder %s184, %s187
      %p193 = scmp.eq.s32.totalorder %s22, 0
      %p194 = por %p192, %p193
      %p195 = scmp.ne.s32.totalorder %s184, %s187
      %p196 = scmp.eq.s32.totalorder %s27, 1
      %p197 = por %p195, %p196
      %p198 = scmp.ne.s32.totalorder %s187, %s188
      %p199 = scmp.eq.s32.totalorder %s27, 0
      %p200 = por %p198, %p199
      %p201 = scmp.ne.s32.totalorder %s187, %s188
      %p202 = scmp.eq.s32.totalorder %s28, 1
      %p203 = por %p201, %p202
      %p205 = scmp.ne.s32.totalorder %s188, %s204
      %p206 = scmp.eq.s32.totalorder %s28, 0
      %p207 = por %p205, %p206
      %s209 = sadd.s32 %s208, 1
      %p212 = scmp.eq.s32.totalorder %s22, 1
      %p213 = scmp.ne.s32.totalorder %s208, %s210
      %p214 = scmp.eq.s32.totalorder %s22, 0
      %p215 = por %p213, %p214
      %p216 = scmp.ne.s32.totalorder %s208, %s210
      %p217 = scmp.eq.s32.totalorder %s27, 1
      %p218 = por %p216, %p217
      %p219 = scmp.ne.s32.totalorder %s210, %s211
      %p220 = scmp.eq.s32.totalorder %s27, 0
      %p221 = por %p219, %p220
      %p222 = scmp.ne.s32.totalorder %s210, %s211
      %p223 = scmp.eq.s32.totalorder %s28, 1
      %p224 = por %p222, %p223
      %p226 = scmp.ne.s32.totalorder %s211, %s225
      %p227 = scmp.eq.s32.totalorder %s28, 0
      %p228 = por %p226, %p227
      %s229 = ssub.s32 %s29, %s41
      %s230 = ssub.s32 %s30, %s37
      %s231 = sor.u32 %s229, %s230
      %p232 = scmp.eq.s32.totalorder %s231, 0
      %s234 = sadd.s32 %s233, 1
      %s235 = scalar_select %p232, %s233, %s234
      %p238 = pneg %p232
      %p239 = scmp.eq.s32.totalorder %s22, 1
      %p240 = por %p238, %p239
      %p241 = scmp.ne.s32.totalorder %s233, %s236
      %p242 = scmp.eq.s32.totalorder %s22, 0
      %p243 = por %p241, %p242
      %p244 = scmp.ne.s32.totalorder %s233, %s236
      %p245 = scmp.eq.s32.totalorder %s27, 1
      %p246 = por %p244, %p245
      %p247 = scmp.ne.s32.totalorder %s236, %s237
      %p248 = scmp.eq.s32.totalorder %s27, 0
      %p249 = por %p247, %p248
      %p250 = scmp.ne.s32.totalorder %s236, %s237
      %p251 = scmp.eq.s32.totalorder %s28, 1
      %p252 = por %p250, %p251
      %p254 = scmp.ne.s32.totalorder %s237, %s253
      %p255 = scmp.eq.s32.totalorder %s28, 0
      %p256 = por %p254, %p255
      %s257 = ssub.s32 %s29, %s41
      %s258 = ssub.s32 %s30, %s37
      %s259 = sor.u32 %s257, %s258
      %p260 = scmp.eq.s32.totalorder %s259, 0
      %s262 = sadd.s32 %s261, 1
      %s263 = scalar_select %p260, %s261, %s262
      %p266 = pneg %p260
      %p267 = scmp.eq.s32.totalorder %s22, 1
      %p268 = por %p266, %p267
      %p269 = scmp.ne.s32.totalorder %s261, %s264
      %p270 = scmp.eq.s32.totalorder %s22, 0
      %p271 = por %p269, %p270
      %p272 = scmp.ne.s32.totalorder %s261, %s264
      %p273 = scmp.eq.s32.totalorder %s27, 1
      %p274 = por %p272, %p273
      %p275 = scmp.ne.s32.totalorder %s264, %s265
      %p276 = scmp.eq.s32.totalorder %s27, 0
      %p277 = por %p275, %p276
      %p278 = scmp.ne.s32.totalorder %s264, %s265
      %p279 = scmp.eq.s32.totalorder %s28, 1
      %p280 = por %p278, %p279
      %p282 = scmp.ne.s32.totalorder %s265, %s281
      %p283 = scmp.eq.s32.totalorder %s28, 0
      %p284 = por %p282, %p283
      %p285 = scmp.le.s32.totalorder 1, %s22
      %p286 = scmp.lt.s32.totalorder %s22, 3
      %p287 = pnand %p285, %p286
      %p288 = pneg %p287
      // Predicated region
      $region9: #{tpu_custom_call.1} parent=5 // pred_check
        _
      $region10: #{tpu_custom_call.1} parent=5 // pred_check_branch
        %290 = sbr.rel (%p287) target = $region12
      $region11: #{tpu_custom_call.1} parent=5 // pred_region
        %s291 = ssub.s32 %s22, 1
        // Predicated region
        $region13: #{tpu_custom_call.1} parent=11 // pred_check
          %p292 = pneg %p109
        $region14: #{tpu_custom_call.1} parent=11 // pred_check_branch
          %294 = sbr.rel (%p292) target = $region16
        $region15: #{tpu_custom_call.1} parent=11 // pred_region
          _
        $region16: #{tpu_custom_call.1} parent=11 // pred_fallthru
          _
        // Predicated region
        $region17: #{tpu_custom_call.1} parent=11 // pred_check
          %p295 = pneg %p130
        $region18: #{tpu_custom_call.1} parent=11 // pred_check_branch
          %297 = sbr.rel (%p295) target = $region20
        $region19: #{tpu_custom_call.1} parent=11 // pred_region
          _
        $region20: #{tpu_custom_call.1} parent=11 // pred_fallthru
          _
        // Predicated region
        $region21: #{tpu_custom_call.1} parent=11 // pred_check
          %p298 = pneg %p151
        $region22: #{tpu_custom_call.1} parent=11 // pred_check_branch
          %300 = sbr.rel (%p298) target = $region24
        $region23: #{tpu_custom_call.1} parent=11 // pred_region
          _
        $region24: #{tpu_custom_call.1} parent=11 // pred_fallthru
          _
        // Predicated region
        $region25: #{tpu_custom_call.1} parent=11 // pred_check
          %p301 = pneg %p172
        $region26: #{tpu_custom_call.1} parent=11 // pred_check_branch
          %303 = sbr.rel (%p301) target = $region28
        $region27: #{tpu_custom_call.1} parent=11 // pred_region
          _
        $region28: #{tpu_custom_call.1} parent=11 // pred_fallthru
          _
        // Predicated region
        $region29: #{tpu_custom_call.1} parent=11 // pred_check
          %p304 = pneg %p221
        $region30: #{tpu_custom_call.1} parent=11 // pred_check_branch
          %306 = sbr.rel (%p304) target = $region32
        $region31: #{tpu_custom_call.1} parent=11 // pred_region
          _
        $region32: #{tpu_custom_call.1} parent=11 // pred_fallthru
          _
      $region12: #{tpu_custom_call.1} parent=5 // pred_fallthru
        _
      %p307 = scmp.lt.s32.totalorder %s22, 2
      // Predicated region
      $region33: #{tpu_custom_call.1} parent=5 // pred_check
        %p308 = pneg %p307
      $region34: #{tpu_custom_call.1} parent=5 // pred_check_branch
        %310 = sbr.rel (%p308) target = $region36
      $region35: #{tpu_custom_call.1} parent=5 // pred_region
        // Predicated region
        $region37: #{tpu_custom_call.1} parent=35 // pred_check
          %p311 = pneg %p56
        $region38: #{tpu_custom_call.1} parent=35 // pred_check_branch
          %313 = sbr.rel (%p311) target = $region40
        $region39: #{tpu_custom_call.1} parent=35 // pred_region
          %p314 = scmp.lt.s32.totalorder %s29, 1
          %s315 = scalar_select %p314, %s29, 1
          %p316 = scmp.lt.s32.totalorder %s30, 0
          %s317 = scalar_select %p316, %s30, 0
          %s318 = sadd.s32 %s317, %s315
          %s319 = smul.addr %s318, 4
          %s320 = scalar_lea.vmem %s0, %s319
        $region40: #{tpu_custom_call.1} parent=35 // pred_fallthru
          _
        // Predicated region
        $region41: #{tpu_custom_call.1} parent=35 // pred_check
          %p321 = pneg %p82
        $region42: #{tpu_custom_call.1} parent=35 // pred_check_branch
          %323 = sbr.rel (%p321) target = $region44
        $region43: #{tpu_custom_call.1} parent=35 // pred_region
          %p324 = scmp.lt.s32.totalorder %s29, 1
          %s325 = scalar_select %p324, %s29, 1
          %s326 = smul.addr %s325, 16
          %s327 = smul.addr %s326, 4
          %s328 = scalar_lea.vmem %s1, %s327
        $region44: #{tpu_custom_call.1} parent=35 // pred_fallthru
          _
        // Predicated region
        $region45: #{tpu_custom_call.1} parent=35 // pred_check
          %p329 = pneg %p194
        $region46: #{tpu_custom_call.1} parent=35 // pred_check_branch
          %331 = sbr.rel (%p329) target = $region48
        $region47: #{tpu_custom_call.1} parent=35 // pred_region
          %p332 = scmp.lt.s32.totalorder %s29, 1
          %s333 = scalar_select %p332, %s29, 1
          %p334 = scmp.lt.s32.totalorder %s30, 0
          %s335 = scalar_select %p334, %s30, 0
          %s336 = sadd.s32 %s335, %s333
          %s337 = smul.addr %s336, 2
          %s338 = scalar_lea.vmem %s6, %s337
        $region48: #{tpu_custom_call.1} parent=35 // pred_fallthru
          _
      $region36: #{tpu_custom_call.1} parent=5 // pred_fallthru
        _
      %p339 = scmp.le.s32.totalorder 1, %s22
      %p340 = scmp.lt.s32.totalorder %s22, 3
      %p341 = pnand %p339, %p340
      %p342 = pneg %p341
      // Predicated region
      $region49: #{tpu_custom_call.1} parent=5 // pred_check
        _
      $region50: #{tpu_custom_call.1} parent=5 // pred_check_branch
        %344 = sbr.rel (%p341) target = $region52
      $region51: #{tpu_custom_call.1} parent=5 // pred_region
        %s345 = ssub.s32 %s22, 1
        %p346 = scmp.lt.s32.totalorder %s31, 1
        %s347 = scalar_select %p346, %s31, 1
        %p348 = scmp.lt.s32.totalorder %s32, 0
        %s349 = scalar_select %p348, %s32, 0
        %s350 = sadd.s32 %s349, %s347
        %s351 = smul.addr %s350, 4
        %s352 = scalar_lea.vmem %s0, %s351
        %p353 = pneg %p62
        %p354 = pneg %p59
        %p355 = scmp.lt.s32.totalorder %s31, 1
        %s356 = scalar_select %p355, %s31, 1
        %s357 = smul.addr %s356, 16
        %s358 = smul.addr %s357, 4
        %s359 = scalar_lea.vmem %s1, %s358
        %p360 = pneg %p88
        %p361 = pneg %p85
        %p362 = pneg %p109
        %p363 = pneg %p106
        %p364 = pneg %p130
        %p365 = pneg %p127
        %p366 = pneg %p151
        %p367 = pneg %p148
        %p368 = pneg %p172
        %p369 = pneg %p169
        %p370 = scmp.lt.s32.totalorder %s31, 1
        %s371 = scalar_select %p370, %s31, 1
        %p372 = scmp.lt.s32.totalorder %s32, 0
        %s373 = scalar_select %p372, %s32, 0
        %s374 = sadd.s32 %s373, %s371
        %s375 = smul.addr %s374, 2
        %s376 = scalar_lea.vmem %s6, %s375
        %p377 = pneg %p200
        %p378 = pneg %p197
        %p379 = pneg %p221
        %p380 = pneg %p218
        %p381 = pneg %p249
        %p382 = pneg %p246
        %s383 = sand.u32 %s236, 1
        %s384 = scalar_lea.sflag [#allocation3], %s383
        %s385 = sand.u32 %s236, 1
        %s386 = smul.addr %s385, 8
        %s387 = scalar_lea.vmem [#allocation2], %s386
        %p388 = pneg %p277
        %p389 = pneg %p274
        %s390 = sand.u32 %s264, 1
        %s391 = scalar_lea.sflag [#allocation5], %s390
        %s392 = sand.u32 %s264, 1
        %s393 = smul.addr %s392, 8
        %s394 = scalar_lea.vmem [#allocation4], %s393
        %p395 = scmp.lt.s32.totalorder %s31, 1
        %s396 = scalar_select %p395, %s31, 1
        %p397 = scmp.lt.s32.totalorder %s32, 0
        %s398 = scalar_select %p397, %s32, 0
        %s399 = sadd.s32 %s398, %s396
        %s400 = smul.addr %s399, 4
        %s401 = scalar_lea.vmem %s0, %s400
        %p402 = scmp.lt.s32.totalorder %s31, 1
        %s403 = scalar_select %p402, %s31, 1
        %s404 = smul.addr %s403, 16
        %s405 = smul.addr %s404, 4
        %s406 = scalar_lea.vmem %s1, %s405
        %p407 = scmp.lt.s32.totalorder %s31, 1
        %s408 = scalar_select %p407, %s31, 1
        %p409 = scmp.lt.s32.totalorder %s32, 0
        %s410 = scalar_select %p409, %s32, 0
        %s411 = sadd.s32 %s410, %s408
        %s412 = smul.addr %s411, 2
        %s413 = scalar_lea.vmem %s6, %s412
        %v417 = vld [vmem:[%s406] sm:$0xf]
        %v418 = vld [vmem:[%s406 + $0x4] sm:$0xf]
        %v419 = vld [vmem:[%s406 + $0x8] sm:$0xf]
        %v420 = vld [vmem:[%s406 + $0xc] sm:$0xf]
        %v421 = vld [vmem:[%s406 + $0x10] sm:$0xf]
        %v422 = vld [vmem:[%s406 + $0x14] sm:$0xf]
        %v423 = vld [vmem:[%s406 + $0x18] sm:$0xf]
        %v424 = vld [vmem:[%s406 + $0x1c] sm:$0xf]
        %v425 = vld [vmem:[%s406 + $0x20] sm:$0xf]
        %v426 = vld [vmem:[%s406 + $0x24] sm:$0xf]
        %v427 = vld [vmem:[%s406 + $0x28] sm:$0xf]
        %v428 = vld [vmem:[%s406 + $0x2c] sm:$0xf]
        %v429 = vld [vmem:[%s406 + $0x30] sm:$0xf]
        %v430 = vld [vmem:[%s406 + $0x34] sm:$0xf]
        %v431 = vld [vmem:[%s406 + $0x38] sm:$0xf]
        %v432 = vld [vmem:[%s406 + $0x3c] sm:$0xf]
        %v433 = vld [vmem:[%s4] sm:$0xff]
        %v434 = vld [vmem:[%s4 + $0x8] sm:$0x33]
        %v435 = vld [vmem:[%s5] sm:$0x3]
        %v437 = vlaneseq
        %v438 = vshrl.u32 %v437, 7
        %v439 = vsub.s32 0, %v438
        %v440 = vrot.slane %v435, %v439
        %v441 = vlaneseq
        %v442 = vshrl.u32 %v441, 7
        %v443 = vsub.s32 1, %v442
        %v444 = vrot.slane %v435, %v443
        %v463 = vunpack.c.l.b16 %v417
        %v464 = vunpack.c.l.b16 %v418
        %v465 = vunpack.c.l.b16 %v419
        %v466 = vunpack.c.l.b16 %v420
        %v467 = vunpack.c.l.b16 %v421
        %v468 = vunpack.c.l.b16 %v422
        %v469 = vunpack.c.l.b16 %v423
        %v470 = vunpack.c.l.b16 %v424
        %v471 = vunpack.c.l.b16 %v425
        %v472 = vunpack.c.l.b16 %v426
        %v473 = vunpack.c.l.b16 %v427
        %v474 = vunpack.c.l.b16 %v428
        %v475 = vunpack.c.l.b16 %v429
        %v476 = vunpack.c.l.b16 %v430
        %v477 = vunpack.c.l.b16 %v431
        %v478 = vunpack.c.l.b16 %v432
        %v479 = vpack.c.b16 %v464, %v463
        %v480 = vpack.c.b16 %v466, %v465
        %v481 = vpack.c.b16 %v468, %v467
        %v482 = vpack.c.b16 %v470, %v469
        %v483 = vpack.c.b16 %v472, %v471
        %v484 = vpack.c.b16 %v474, %v473
        %v485 = vpack.c.b16 %v476, %v475
        %v486 = vpack.c.b16 %v478, %v477
        %v489 = vunpack.c.l.b16 %v433
        %v490 = vunpack.c.h.b16 %v433
        %v491 = vunpack.c.l.b16 %v434
        %v492 = vunpack.c.h.b16 %v434
        %v493 = vpack.c.b16 %v491, %v489
        %v494 = vpack.c.b16 %v492, %v490
        %vm495 = vcmask 97280
        %v497 = vsel %vm495, %v479, 0
        %v500 = vsel %vm495, %v480, 0
        %v503 = vsel %vm495, %v481, 0
        %v506 = vsel %vm495, %v482, 0
        %v509 = vsel %vm495, %v483, 0
        %v512 = vsel %vm495, %v484, 0
        %v515 = vsel %vm495, %v485, 0
        %v518 = vsel %vm495, %v486, 0
        %vm520 = vcmask 1045504
        %v522 = vsel %vm520, %v493, 0
        %v525 = vsel %vm520, %v494, 0
        %527 = vmatprep.subr.bf16.mxu0 %v525
        %528 = vmatpush1.bf16.msra.mxu0 %v522
        %529 = vmatprep.subr.bf16.mxu0 0
        %530 = vmatpush1.bf16.msra.mxu0 0
        %531 = vmatprep.subr.bf16.mxu0 0
        %532 = vmatpush1.bf16.msra.mxu0 0
        %533 = vmatprep.subr.bf16.mxu0 0
        %534 = vmatpush1.bf16.msra.mxu0 0
        %535 = vmatprep.subr.bf16.mxu0 0
        %536 = vmatpush1.bf16.msra.mxu0 0
        %537 = vmatprep.subr.bf16.mxu0 0
        %538 = vmatpush1.bf16.msra.mxu0 0
        %539 = vmatprep.subr.bf16.mxu0 0
        %540 = vmatpush1.bf16.msra.mxu0 0
        %541 = vmatprep.subr.bf16.mxu0 0
        %542 = vmatpush1.bf16.msra.mxu0 0
        %543 = vmatprep.subr.bf16.mxu0 0
        %544 = vmatpush1.bf16.msra.mxu0 0
        %545 = vmatprep.subr.bf16.mxu0 0
        %546 = vmatpush1.bf16.msra.mxu0 0
        %547 = vmatprep.subr.bf16.mxu0 0
        %548 = vmatpush1.bf16.msra.mxu0 0
        %549 = vmatprep.subr.bf16.mxu0 0
        %550 = vmatpush1.bf16.msra.mxu0 0
        %551 = vmatprep.subr.bf16.mxu0 0
        %552 = vmatpush1.bf16.msra.mxu0 0
        %553 = vmatprep.subr.bf16.mxu0 0
        %554 = vmatpush1.bf16.msra.mxu0 0
        %555 = vmatprep.subr.bf16.mxu0 0
        %556 = vmatpush1.bf16.msra.mxu0 0
        %557 = vmatprep.subr.bf16.mxu0 0
        %558 = vmatpush1.bf16.msra.mxu0 0
        %559 = vmatprep.mubr.bf16.mxu0 0
        %560 = vmatmul.mubr.bf16.gmra.mrb[0].mxu0 %v497
        %v561 = vpop.f32.mrb[0].mxu0
        %v562 = vadd.f32 %v440, %v561
        %v563 = vpop.f32.mrb[0].mxu0
        %v564 = vadd.f32 %v444, %v563
        %v565 = vpop.f32.mrb[0].mxu0
        %v566 = vadd.f32 %v440, %v565
        %v567 = vpop.f32.mrb[0].mxu0
        %v568 = vadd.f32 %v444, %v567
        %569 = vmatprep.mubr.bf16.mxu0 0
        %570 = vmatmul.mubr.bf16.gmra.mrb[0].mxu0 %v500
        %v571 = vpop.f32.mrb[0].mxu0
        %v572 = vadd.f32 %v440, %v571
        %v573 = vpop.f32.mrb[0].mxu0
        %v574 = vadd.f32 %v444, %v573
        %v575 = vpop.f32.mrb[0].mxu0
        %v576 = vadd.f32 %v440, %v575
        %v577 = vpop.f32.mrb[0].mxu0
        %v578 = vadd.f32 %v444, %v577
        %579 = vmatprep.mubr.bf16.mxu0 0
        %580 = vmatmul.mubr.bf16.gmra.mrb[0].mxu0 %v503
        %v581 = vpop.f32.mrb[0].mxu0
        %v582 = vadd.f32 %v440, %v581
        %v583 = vpop.f32.mrb[0].mxu0
        %v584 = vadd.f32 %v444, %v583
        %v585 = vpop.f32.mrb[0].mxu0
        %v586 = vadd.f32 %v440, %v585
        %v587 = vpop.f32.mrb[0].mxu0
        %v588 = vadd.f32 %v444, %v587
        %589 = vmatprep.mubr.bf16.mxu0 0
        %590 = vmatmul.mubr.bf16.gmra.mrb[0].mxu0 %v506
        %v591 = vpop.f32.mrb[0].mxu0
        %v592 = vadd.f32 %v440, %v591
        %v593 = vpop.f32.mrb[0].mxu0
        %v594 = vadd.f32 %v444, %v593
        %v595 = vpop.f32.mrb[0].mxu0
        %v596 = vadd.f32 %v440, %v595
        %v597 = vpop.f32.mrb[0].mxu0
        %v598 = vadd.f32 %v444, %v597
        %599 = vmatprep.mubr.bf16.mxu0 0
        %600 = vmatmul.mubr.bf16.gmra.mrb[0].mxu0 %v509
        %v601 = vpop.f32.mrb[0].mxu0
        %v602 = vadd.f32 %v440, %v601
        %v603 = vpop.f32.mrb[0].mxu0
        %v604 = vadd.f32 %v444, %v603
        %v605 = vpop.f32.mrb[0].mxu0
        %v606 = vadd.f32 %v440, %v605
        %v607 = vpop.f32.mrb[0].mxu0
        %v608 = vadd.f32 %v444, %v607
        %609 = vmatprep.mubr.bf16.mxu0 0
        %610 = vmatmul.mubr.bf16.gmra.mrb[0].mxu0 %v512
        %v611 = vpop.f32.mrb[0].mxu0
        %v612 = vadd.f32 %v440, %v611
        %v613 = vpop.f32.mrb[0].mxu0
        %v614 = vadd.f32 %v444, %v613
        %v615 = vpop.f32.mrb[0].mxu0
        %v616 = vadd.f32 %v440, %v615
        %v617 = vpop.f32.mrb[0].mxu0
        %v618 = vadd.f32 %v444, %v617
        %619 = vmatprep.mubr.bf16.mxu0 0
        %620 = vmatmul.mubr.bf16.gmra.mrb[0].mxu0 %v515
        %v621 = vpop.f32.mrb[0].mxu0
        %v622 = vadd.f32 %v440, %v621
        %v623 = vpop.f32.mrb[0].mxu0
        %v624 = vadd.f32 %v444, %v623
        %v625 = vpop.f32.mrb[0].mxu0
        %v626 = vadd.f32 %v440, %v625
        %v627 = vpop.f32.mrb[0].mxu0
        %v628 = vadd.f32 %v444, %v627
        %629 = vmatprep.mubr.bf16.mxu0 0
        %630 = vmatmul.mubr.bf16.gmra.mrb[0].mxu0 %v518
        %v631 = vpop.f32.mrb[0].mxu0
        %v632 = vadd.f32 %v440, %v631
        %v633 = vpop.f32.mrb[0].mxu0
        %v634 = vadd.f32 %v444, %v633
        %v635 = vpop.f32.mrb[0].mxu0
        %v636 = vadd.f32 %v440, %v635
        %v637 = vpop.f32.mrb[0].mxu0
        %v638 = vadd.f32 %v444, %v637
        %639 = vdwg.mxu0
        %v640 = vpack.c.bf16 %v566, %v562
        %v641 = vpack.c.bf16 %v568, %v564
        %v642 = vpack.c.bf16 %v576, %v572
        %v643 = vpack.c.bf16 %v578, %v574
        %v644 = vpack.c.bf16 %v586, %v582
        %v645 = vpack.c.bf16 %v588, %v584
        %v646 = vpack.c.bf16 %v596, %v592
        %v647 = vpack.c.bf16 %v598, %v594
        %v648 = vpack.c.bf16 %v606, %v602
        %v649 = vpack.c.bf16 %v608, %v604
        %v650 = vpack.c.bf16 %v616, %v612
        %v651 = vpack.c.bf16 %v618, %v614
        %v652 = vpack.c.bf16 %v626, %v622
        %v653 = vpack.c.bf16 %v628, %v624
        %v654 = vpack.c.bf16 %v636, %v632
        %v655 = vpack.c.bf16 %v638, %v634
        %v656 = vld [vmem:[%s401] sm:$0xf]
        %v657 = vld [vmem:[%s2] sm:$0xf]
        %v658 = vld [vmem:[%s2 + $0x4] sm:$0xf]
        %v659 = vld [vmem:[%s3] sm:$0x1]
        %v661 = vlaneseq
        %v662 = vshrl.u32 %v661, 7
        %v663 = vsub.s32 0, %v662
        %v664 = vrot.slane %v659, %v663
        %v668 = vunpack.c.l.b16 %v657
        %v669 = vunpack.c.l.b16 %v658
        %v670 = vpack.c.b16 %v669, %v668
        %vm672 = vcmask 130048
        %v674 = vsel %vm672, %v656, 0
        %676 = vmatprep.subr.bf16.mxu0 0
        %677 = vmatpush1.bf16.msra.mxu0 %v670
        %678 = vmatprep.subr.bf16.mxu0 0
        %679 = vmatpush1.bf16.msra.mxu0 0
        %680 = vmatprep.subr.bf16.mxu0 0
        %681 = vmatpush1.bf16.msra.mxu0 0
        %682 = vmatprep.subr.bf16.mxu0 0
        %683 = vmatpush1.bf16.msra.mxu0 0
        %684 = vmatprep.subr.bf16.mxu0 0
        %685 = vmatpush1.bf16.msra.mxu0 0
        %686 = vmatprep.subr.bf16.mxu0 0
        %687 = vmatpush1.bf16.msra.mxu0 0
        %688 = vmatprep.subr.bf16.mxu0 0
        %689 = vmatpush1.bf16.msra.mxu0 0
        %690 = vmatprep.subr.bf16.mxu0 0
        %691 = vmatpush1.bf16.msra.mxu0 0
        %692 = vmatprep.subr.bf16.mxu0 0
        %693 = vmatpush1.bf16.msra.mxu0 0
        %694 = vmatprep.subr.bf16.mxu0 0
        %695 = vmatpush1.bf16.msra.mxu0 0
        %696 = vmatprep.subr.bf16.mxu0 0
        %697 = vmatpush1.bf16.msra.mxu0 0
        %698 = vmatprep.subr.bf16.mxu0 0
        %699 = vmatpush1.bf16.msra.mxu0 0
        %700 = vmatprep.subr.bf16.mxu0 0
        %701 = vmatpush1.bf16.msra.mxu0 0
        %702 = vmatprep.subr.bf16.mxu0 0
        %703 = vmatpush1.bf16.msra.mxu0 0
        %704 = vmatprep.subr.bf16.mxu0 0
        %705 = vmatpush1.bf16.msra.mxu0 0
        %706 = vmatprep.subr.bf16.mxu0 0
        %707 = vmatpush1.bf16.msra.mxu0 0
        %708 = vmatprep.mubr.bf16.mxu0 0
        %709 = vmatmul.mubr.bf16.gmra.mrb[0].mxu0 %v674
        %v710 = vpop.f32.mrb[0].mxu0
        %v711 = vadd.f32 %v664, %v710
        %v712 = vpop.f32.mrb[0].mxu0
        %v713 = vpop.f32.mrb[0].mxu0
        %v714 = vpop.f32.mrb[0].mxu0
        %715 = vdwg.mxu0
        %v716 = vpack.c.bf16 %v711, %v711
        %717 = vmatprep.subr.bf16.mxu0 0
        %718 = vmatpush1.bf16.xpose.msra.mxu0 %v640
        %719 = vmatprep.subr.bf16.mxu0 0
        %720 = vmatpush1.bf16.xpose.msra.mxu0 %v642
        %721 = vmatprep.subr.bf16.mxu0 0
        %722 = vmatpush1.bf16.xpose.msra.mxu0 %v644
        %723 = vmatprep.subr.bf16.mxu0 0
        %724 = vmatpush1.bf16.xpose.msra.mxu0 %v646
        %725 = vmatprep.subr.bf16.mxu0 0
        %726 = vmatpush1.bf16.xpose.msra.mxu0 %v648
        %727 = vmatprep.subr.bf16.mxu0 0
        %728 = vmatpush1.bf16.xpose.msra.mxu0 %v650
        %729 = vmatprep.subr.bf16.mxu0 0
        %730 = vmatpush1.bf16.xpose.msra.mxu0 %v652
        %731 = vmatprep.subr.bf16.mxu0 0
        %732 = vmatpush1.bf16.xpose.msra.mxu0 %v654
        %733 = vmatprep.subr.bf16.mxu0 0
        %734 = vmatpush1.bf16.xpose.msra.mxu0 0
        %735 = vmatprep.subr.bf16.mxu0 0
        %736 = vmatpush1.bf16.xpose.msra.mxu0 0
        %737 = vmatprep.subr.bf16.mxu0 0
        %738 = vmatpush1.bf16.xpose.msra.mxu0 0
        %739 = vmatprep.subr.bf16.mxu0 0
        %740 = vmatpush1.bf16.xpose.msra.mxu0 0
        %741 = vmatprep.subr.bf16.mxu0 0
        %742 = vmatpush1.bf16.xpose.msra.mxu0 0
        %743 = vmatprep.subr.bf16.mxu0 0
        %744 = vmatpush1.bf16.xpose.msra.mxu0 0
        %745 = vmatprep.subr.bf16.mxu0 0
        %746 = vmatpush1.bf16.xpose.msra.mxu0 0
        %747 = vmatprep.subr.bf16.mxu0 0
        %748 = vmatpush1.bf16.xpose.msra.mxu0 0
        %749 = vmatprep.mubr.bf16.mxu0 0
        %750 = vmatmul.mubr.bf16.gmra.mrb[0].mxu0 %v716
        %v751 = vpop.f32.mrb[0].mxu0
        %v752 = vadd.f32 0.0, %v751
        %v753 = vpop.f32.mrb[0].mxu0
        %v754 = vpop.f32.mrb[0].mxu0
        %v755 = vpop.f32.mrb[0].mxu0
        %756 = vdwg.mxu0
        %v757 = vld [vmem:[%s413] sm:$0x3]
        %vm758 = vnez %v757
        %v759 = vsel %vm758, 16843009, 0
        %v760 = vunpack.c.0.s8 %v759
        %vm761 = vcmp.ne.s32.totalorder %v760, 0
        %v762 = vsel %vm761, %v752, -1e+09
        %v763 = vld [vmem:[%s7] sm:$0x1]
        %v765 = vlaneseq
        %v766 = vshrl.u32 %v765, 7
        %v767 = vsub.s32 0, %v766
        %v768 = vrot.slane %v763, %v767
        %v770 = vadd.f32 %v762, %v768
        %771 = vmax.xlane.f32.xlu0 %v770
        %v772 = vpop.xlane.xlu0 %771
        %v773 = vsub.f32 %v770, %v772
        %v774 = vmul.f32 %v773, 1.442695
        %v775 = vpow.pop %v774
        %776 = vadd.xlane.f32.xlu0 %v775
        %v777 = vpop.xlane.xlu0 %776
        %v778 = vrcp.pop %v777
        %v779 = vmul.f32 %v775, %v778
        %v780 = vpack.c.bf16 %v779, %v779
        %781 = vmatprep.subr.bf16.mxu0 0
        %782 = vmatpush1.bf16.msra.mxu0 %v641
        %783 = vmatprep.subr.bf16.mxu0 0
        %784 = vmatpush1.bf16.msra.mxu0 %v643
        %785 = vmatprep.subr.bf16.mxu0 0
        %786 = vmatpush1.bf16.msra.mxu0 %v645
        %787 = vmatprep.subr.bf16.mxu0 0
        %788 = vmatpush1.bf16.msra.mxu0 %v647
        %789 = vmatprep.subr.bf16.mxu0 0
        %790 = vmatpush1.bf16.msra.mxu0 %v649
        %791 = vmatprep.subr.bf16.mxu0 0
        %792 = vmatpush1.bf16.msra.mxu0 %v651
        %793 = vmatprep.subr.bf16.mxu0 0
        %794 = vmatpush1.bf16.msra.mxu0 %v653
        %795 = vmatprep.subr.bf16.mxu0 0
        %796 = vmatpush1.bf16.msra.mxu0 %v655
        %797 = vmatprep.subr.bf16.mxu0 0
        %798 = vmatpush1.bf16.msra.mxu0 0
        %799 = vmatprep.subr.bf16.mxu0 0
        %800 = vmatpush1.bf16.msra.mxu0 0
        %801 = vmatprep.subr.bf16.mxu0 0
        %802 = vmatpush1.bf16.msra.mxu0 0
        %803 = vmatprep.subr.bf16.mxu0 0
        %804 = vmatpush1.bf16.msra.mxu0 0
        %805 = vmatprep.subr.bf16.mxu0 0
        %806 = vmatpush1.bf16.msra.mxu0 0
        %807 = vmatprep.subr.bf16.mxu0 0
        %808 = vmatpush1.bf16.msra.mxu0 0
        %809 = vmatprep.subr.bf16.mxu0 0
        %810 = vmatpush1.bf16.msra.mxu0 0
        %811 = vmatprep.subr.bf16.mxu0 0
        %812 = vmatpush1.bf16.msra.mxu0 0
        %813 = vmatprep.mubr.bf16.mxu0 0
        %814 = vmatmul.mubr.bf16.gmra.mrb[0].mxu0 %v780
        %v815 = vpop.f32.mrb[0].mxu0
        %v816 = vadd.f32 0.0, %v815
        %v817 = vpop.f32.mrb[0].mxu0
        %v818 = vpop.f32.mrb[0].mxu0
        %v819 = vpop.f32.mrb[0].mxu0
        %820 = vdwg.mxu0
        %821 = vst [vmem:[%s387] sm:$0xff] %v816
        %822 = vst [vmem:[%s394] sm:$0xff] %v779
        %s823 = sand.u32 %s236, 1
        %s824 = scalar_lea.sflag [#allocation3], %s823
        %s825 = sand.u32 %s236, 1
        %s826 = smul.addr %s825, 8
        %s827 = scalar_lea.vmem [#allocation2], %s826
        %s828 = sand.u32 %s264, 1
        %s829 = scalar_lea.sflag [#allocation5], %s828
        %s830 = sand.u32 %s264, 1
        %s831 = smul.addr %s830, 8
        %s832 = scalar_lea.vmem [#allocation4], %s831
        // Predicated region
        $region53: #{tpu_custom_call.1} parent=51 // pred_check
          %p833 = pneg %p246
        $region54: #{tpu_custom_call.1} parent=51 // pred_check_branch
          %835 = sbr.rel (%p833) target = $region56
        $region55: #{tpu_custom_call.1} parent=51 // pred_region
          %s837 = ssub.s32 128, 128
          %838 = vsyncadd %s824, %s837
          %s839 = sadd.s32 %s32, %s31
          %s840 = smul.addr %s839, 128
          %s841 = scalar_lea.hbm %s8, %s840
          %s843 = sshll.u32 %s827, 4
          %s844 = int_to_ptr.vmem [resolvable:$true] %s843
          %846 = dma.vmem_to_hbm [thread:$0]  %s844, 128, %s841, %s824
        $region56: #{tpu_custom_call.1} parent=51 // pred_fallthru
          _
        // Predicated region
        $region57: #{tpu_custom_call.1} parent=51 // pred_check
          %p847 = pneg %p274
        $region58: #{tpu_custom_call.1} parent=51 // pred_check_branch
          %849 = sbr.rel (%p847) target = $region60
        $region59: #{tpu_custom_call.1} parent=51 // pred_region
          %s851 = ssub.s32 128, 128
          %852 = vsyncadd %s829, %s851
          %s853 = sadd.s32 %s32, %s31
          %s854 = smul.addr %s853, 128
          %s855 = scalar_lea.hbm %s9, %s854
          %s857 = sshll.u32 %s832, 4
          %s858 = int_to_ptr.vmem [resolvable:$true] %s857
          %860 = dma.vmem_to_hbm [thread:$0]  %s858, 128, %s855, %s829
        $region60: #{tpu_custom_call.1} parent=51 // pred_fallthru
          _
      $region52: #{tpu_custom_call.1} parent=5 // pred_fallthru
        _
      %p861 = scmp.le.s32.totalorder 2, %s22
      // Predicated region
      $region61: #{tpu_custom_call.1} parent=5 // pred_check
        %p862 = pneg %p861
      $region62: #{tpu_custom_call.1} parent=5 // pred_check_branch
        %864 = sbr.rel (%p862) target = $region64
      $region63: #{tpu_custom_call.1} parent=5 // pred_region
        %s865 = ssub.s32 %s22, 2
        // Predicated region
        $region65: #{tpu_custom_call.1} parent=63 // pred_check
          %p866 = pneg %p252
        $region66: #{tpu_custom_call.1} parent=63 // pred_check_branch
          %868 = sbr.rel (%p866) target = $region68
        $region67: #{tpu_custom_call.1} parent=63 // pred_region
          %s869 = sand.u32 %s237, 1
          %s870 = scalar_lea.sflag [#allocation3], %s869
          %s871 = sand.u32 %s237, 1
          %s872 = smul.addr %s871, 8
          %s873 = scalar_lea.vmem [#allocation2], %s872
          %874 = dma.done %s870, 128
        $region68: #{tpu_custom_call.1} parent=63 // pred_fallthru
          _
        // Predicated region
        $region69: #{tpu_custom_call.1} parent=63 // pred_check
          %p875 = pneg %p280
        $region70: #{tpu_custom_call.1} parent=63 // pred_check_branch
          %877 = sbr.rel (%p875) target = $region72
        $region71: #{tpu_custom_call.1} parent=63 // pred_region
          %s878 = sand.u32 %s265, 1
          %s879 = scalar_lea.sflag [#allocation5], %s878
          %s880 = sand.u32 %s265, 1
          %s881 = smul.addr %s880, 8
          %s882 = scalar_lea.vmem [#allocation4], %s881
          %883 = dma.done %s879, 128
        $region72: #{tpu_custom_call.1} parent=63 // pred_fallthru
          _
      $region64: #{tpu_custom_call.1} parent=5 // pred_fallthru
        _
    $region6: #{tpu_custom_call.1} parent=1 // loop_footer
      %s26 = sadd.s32 1, %s22
    $region7: #{tpu_custom_call.1} parent=1 // loop_footer_branch
      %21 = sbr.rel target = $region3
    $region8: #{tpu_custom_call.1} parent=1 // loop_exit
      _
    %884 = vsyncpa [#allocation3], 1
    %s885 = scalar_lea.sflag [#allocation3], 1
    %886 = vsyncpa %s885, 1
    %887 = vsyncpa [#allocation5], 1
    %s888 = scalar_lea.sflag [#allocation5], 1
    %889 = vsyncpa %s888, 1

</llo_original>
